<compile_context>
chip_gen: v7x
topology: tpu7x:2x2x1
jax: 0.10.0
libtpu: 0.0.40
codegen_flags: <defaults>
</compile_context>

<pallas_src>
import math
import functools
from dataclasses import dataclass
from typing import List, Optional

import numpy as np
import jax
import jax.numpy as jnp
from jax.experimental import pallas as pl
from jax.experimental.pallas import tpu as pltpu

_MIB = 1024 * 1024


# --------------------------------------------------------------------------- #
# Pallas kernel: neox-style rotary rotation on flattened (tokens, heads*hs).
# --------------------------------------------------------------------------- #
def _rope_kernel(q_ref, k_ref, cos_ref, sina_ref, sinb_ref,
                 q_out_ref, k_out_ref, *, head_size: int, rotary_dim: int):
    half = rotary_dim // 2
    cos_h = cos_ref[...]     # (Tt, head_size): cos per lane, 1 on the tail
    sina_h = sina_ref[...]   # (Tt, head_size): -sin on lanes [0, half), else 0
    sinb_h = sinb_ref[...]   # (Tt, head_size): +sin on lanes [half, rot), else 0

    # Memoize the lane-tiled tables (trace-time) so q and k with the same head
    # count share one concatenate — JAX does not CSE these.
    tiled = {}

    def tables_for(n_heads: int):
        if n_heads not in tiled:
            if n_heads == 1:
                tiled[n_heads] = (cos_h, sina_h, sinb_h)
            else:
                tiled[n_heads] = tuple(
                    jnp.concatenate([t] * n_heads, axis=-1)
                    for t in (cos_h, sina_h, sinb_h))
        return tiled[n_heads]

    def rotate(x_ref, out_ref):
        x = x_ref[...]                                 # (Tt, n_heads*head_size)
        w = x.shape[-1]
        cos, sina, sinb = tables_for(w // head_size)
        ax = x.ndim - 1
        # pltpu.roll(x, s, ax)[j] == x[(j - s) % w]
        fwd = pltpu.roll(x, shift=w - half, axis=ax)   # lane j <- x[j + half]
        bwd = pltpu.roll(x, shift=half, axis=ax)       # lane j <- x[j - half]
        # Lanes whose roll wrapped across a head boundary hit the zero region
        # of sinA/sinB, so the formula is exact for full and partial rotary.
        out_ref[...] = (x * cos + fwd * sina + bwd * sinb).astype(out_ref.dtype)

    rotate(q_ref, q_out_ref)
    rotate(k_ref, k_out_ref)


# --------------------------------------------------------------------------- #
# Tiling / VMEM budgeting.
# --------------------------------------------------------------------------- #
def _round_up(x: int, m: int) -> int:
    return (x + m - 1) // m * m


def _vmem_capacity_bytes() -> int:
    """Per-core VMEM capacity (generation-aware), with a conservative fallback."""
    try:
        cap = int(pltpu.get_tpu_info().vmem_capacity_bytes)
        if cap <= 0:
            raise ValueError("bad vmem capacity")
    except Exception:
        cap = 64 * _MIB  # safe on v5e/v6e/v7x
    return max(16 * _MIB, min(cap, 128 * _MIB))


def _choose_tile_t(num_tokens: int, row_bytes: int, budget_bytes: int) -> int:
    """Largest token tile (multiple of 8) fitting the budget, >= 2 grid steps."""
    tile = budget_bytes // max(row_bytes, 1)
    tile = max(8, (tile // 8) * 8)
    tile = min(tile, 4096)
    if num_tokens <= 8:
        return int(num_tokens)
    # Never collapse the grid to one step: keep >= 2 steps so v7x's two
    # TensorCores can both run (one extra ~0.35us step is noise on 1-TC chips).
    tile = min(tile, _round_up(-(-num_tokens // 2), 8))
    return int(tile)


def apply_rope_pallas(query, key, cos_h, sina_h, sinb_h,
                      head_size: int, rotary_dim: int, *,
                      tile_t: Optional[int] = None):
    """Apply neox-style RoPE to query/key.

    query/key: (T, n_heads * head_size). cos_h/sina_h/sinb_h: (T, head_size)
    per-token compact tables in the q/k dtype.
    NOTE: query/key are donated (in-place semantics); do not reuse the inputs.
    """
    T, Wq = query.shape
    Tk, Wk = key.shape
    assert Tk == T
    assert Wq % head_size == 0 and Wk % head_size == 0
    assert cos_h.shape == (T, head_size)

    cap = _vmem_capacity_bytes()
    if tile_t is None:
        q_b = Wq * query.dtype.itemsize
        k_b = Wk * key.dtype.itemsize
        tbl_b = 3 * head_size * cos_h.dtype.itemsize
        live_b = 8 * max(Wq, Wk) * max(query.dtype.itemsize, 2)  # live temporaries
        row = 2 * 2 * (q_b + k_b) + 2 * tbl_b + live_b           # dbl-buffered in+out
        tile_t = _choose_tile_t(T, row, int(cap * 0.55))
    grid = (pl.cdiv(T, tile_t),)

    kernel = functools.partial(_rope_kernel, head_size=head_size,
                               rotary_dim=rotary_dim)

    q_out, k_out = pl.pallas_call(
        kernel,
        grid=grid,
        in_specs=[
            pl.BlockSpec((tile_t, Wq), lambda i: (i, 0)),
            pl.BlockSpec((tile_t, Wk), lambda i: (i, 0)),
            pl.BlockSpec((tile_t, head_size), lambda i: (i, 0)),
            pl.BlockSpec((tile_t, head_size), lambda i: (i, 0)),
            pl.BlockSpec((tile_t, head_size), lambda i: (i, 0)),
        ],
        out_specs=(
            pl.BlockSpec((tile_t, Wq), lambda i: (i, 0)),
            pl.BlockSpec((tile_t, Wk), lambda i: (i, 0)),
        ),
        out_shape=(
            jax.ShapeDtypeStruct((T, Wq), query.dtype),
            jax.ShapeDtypeStruct((T, Wk), key.dtype),
        ),
        input_output_aliases={0: 0, 1: 1},   # in-place q/k, like vLLM
        compiler_params=pltpu.CompilerParams(
            dimension_semantics=("parallel",),
            vmem_limit_bytes=int(cap * 0.70),
        ),
    )(query, key, cos_h, sina_h, sinb_h)
    return q_out, k_out


# --------------------------------------------------------------------------- #
# Module glue: Dynamic-NTK cache logic (host side, matches the torch module).
# --------------------------------------------------------------------------- #
@dataclass
class InputMetadata:
    prompt_lens: List[int]
    context_lens: np.ndarray


class DynamicNTKScalingRotaryEmbeddingQwen:
    """RotaryEmbedding + Qwen's Dynamic-NTK (JAX/Pallas port)."""

    def __init__(self, head_size, rotary_dim, max_position_embeddings, base,
                 is_neox_style, seq_length):
        assert is_neox_style, "Qwen RoPE is neox-style"
        assert rotary_dim % 2 == 0 and rotary_dim <= head_size
        self.head_size = head_size
        self.rotary_dim = rotary_dim
        self.max_position_embeddings = max_position_embeddings
        self.base = base
        self.is_neox_style = is_neox_style
        self._config_seq_length = seq_length
        self._seq_len_cached = 0
        self._ntk_alpha_cached = 1.0
        self.cos_sin_cache = self._compute_cos_sin_cache(self.base,
                                                         max_position_embeddings)

    def _compute_inv_freq(self, base):
        exponent = (np.arange(0, self.rotary_dim, 2, dtype=np.float32)
                    / np.float32(self.rotary_dim))
        return (1.0 / np.power(np.float32(base), exponent)).astype(np.float32)

    def _compute_cos_sin_cache(self, base, n_pos):
        inv_freq = self._compute_inv_freq(base)
        t = np.arange(n_pos, dtype=np.float32)
        freqs = np.einsum("i,j->ij", t, inv_freq).astype(np.float32)
        return np.concatenate([np.cos(freqs), np.sin(freqs)], axis=-1).astype(np.float32)

    def get_ntk_alpha(self, true_seq_len):
        context_value = math.log(true_seq_len / self._config_seq_length, 2) + 1
        ntk_alpha = 2 ** math.ceil(context_value) - 1
        return max(ntk_alpha, 1)

    def _update_cos_sin_cache(self, max_seq_len):
        ntk_alpha = self.get_ntk_alpha(max_seq_len)
        if max_seq_len > self._seq_len_cached or ntk_alpha != self._ntk_alpha_cached:
            base = self.base * ntk_alpha ** (self.rotary_dim / (self.rotary_dim - 2))
            self._seq_len_cached = max(2 * max_seq_len, 16)
            self._ntk_alpha_cached = ntk_alpha
            self.cos_sin_cache = self._compute_cos_sin_cache(base, self._seq_len_cached)

    def forward(self, positions, query, key, input_metadata: InputMetadata, *,
                tile_t: Optional[int] = None):
        # Per-sequence Dynamic-NTK cache selection (host, like the torch loop),
        # emitting three compact per-token, head_size-wide tables in the q/k
        # dtype; the rotation itself runs in one fused Pallas kernel.
        positions_np = np.asarray(positions)
        if len(input_metadata.prompt_lens) > 0:
            seq_lens = [int(s) for s in input_metadata.prompt_lens]
            is_continue = False
        else:
            seq_lens = [int(v) for v in np.asarray(input_metadata.context_lens)]
            is_continue = True
        batch_size = len(seq_lens)
        num_tokens = query.shape[0]
        half = self.rotary_dim // 2
        D = self.head_size

        cos_h = np.ones((num_tokens, D), dtype=np.float32)    # tail lanes -> 1
        sina_h = np.zeros((num_tokens, D), dtype=np.float32)  # -sin on [0, half)
        sinb_h = np.zeros((num_tokens, D), dtype=np.float32)  # +sin on [half, rot)

        _prev = 0
        for i, seq_len in enumerate(seq_lens):
            _start = _prev
            _end = _start + (1 if is_continue else seq_len)
            _slice_end = num_tokens if i == batch_size - 1 else _end
            pos = positions_np[_start:_slice_end]
            self._update_cos_sin_cache(seq_len)
            rows = self.cos_sin_cache[pos]                     # (n, rotary_dim)
            cos = rows[:, :half]
            sin = rows[:, half:]
            cos_h[_start:_slice_end, :half] = cos
            cos_h[_start:_slice_end, half:self.rotary_dim] = cos
            sina_h[_start:_slice_end, :half] = -sin
            sinb_h[_start:_slice_end, half:self.rotary_dim] = sin
            _prev = _end

        tdt = query.dtype   # bf16 tables when q/k are bf16 (halves table traffic)
        return apply_rope_pallas(
            query, key,
            jnp.asarray(cos_h, dtype=tdt),
            jnp.asarray(sina_h, dtype=tdt),
            jnp.asarray(sinb_h, dtype=tdt),
            self.head_size, self.rotary_dim, tile_t=tile_t)


# --------------------------------------------------------------------------- #
# Pure-numpy reference (fresh-module semantics).
# --------------------------------------------------------------------------- #
def reference_rope(positions, query, key, seq_lens, is_continue, head_size,
                   rotary_dim, base, config_seq_length):
    positions = np.asarray(positions)
    q = np.asarray(query, dtype=np.float32)
    k = np.asarray(key, dtype=np.float32)
    half = rotary_dim // 2
    T = q.shape[0]
    qo, ko = q.copy(), k.copy()
    seq_len_cached, alpha_cached = 0, 1.0
    prev = 0
    for i, L in enumerate(seq_lens):
        start = prev
        end = start + (1 if is_continue else int(L))
        slice_end = T if i == len(seq_lens) - 1 else end
        alpha = max(2 ** math.ceil(math.log(L / config_seq_length, 2) + 1) - 1, 1)
        if L > seq_len_cached or alpha != alpha_cached:
            seq_len_cached = max(2 * L, 16)
            alpha_cached = alpha
        b = base * alpha_cached ** (rotary_dim / (rotary_dim - 2))
        exponent = np.arange(0, rotary_dim, 2, dtype=np.float32) / np.float32(rotary_dim)
        inv_freq = (1.0 / np.power(np.float32(b), exponent)).astype(np.float32)
        pos = positions[start:slice_end].astype(np.float32)
        freqs = (pos[:, None] * inv_freq[None, :]).astype(np.float32)
        cos, sin = np.cos(freqs), np.sin(freqs)

        def rot(x):
            t, w = x.shape
            nh = w // head_size
            xr = x.reshape(t, nh, head_size).copy()
            x1 = xr[..., :half].copy()
            x2 = xr[..., half:rotary_dim].copy()
            xr[..., :half] = x1 * cos[:, None, :] - x2 * sin[:, None, :]
            xr[..., half:rotary_dim] = x2 * cos[:, None, :] + x1 * sin[:, None, :]
            return xr.reshape(t, w)

        qo[start:slice_end] = rot(q[start:slice_end])
        ko[start:slice_end] = rot(k[start:slice_end])
        prev = end
    return qo, ko


# --------------------------------------------------------------------------- #
if __name__ == "__main__":
    base = 10000
    max_pos = 64
    config_seq_length = 8

    def run_case(head_size, rotary_dim, n_q, n_kv, seq_lens, is_continue,
                 key_rng, dtype=jnp.float32, tile_t=None, atol=1e-5, rtol=1e-5):
        if is_continue:
            T = len(seq_lens)
            positions = jnp.asarray([l - 1 for l in seq_lens], dtype=jnp.int32)
            meta = InputMetadata(prompt_lens=[],
                                 context_lens=np.asarray(seq_lens, dtype=np.int32))
        else:
            T = sum(seq_lens)
            positions = jnp.concatenate(
                [jnp.arange(l, dtype=jnp.int32) for l in seq_lens], axis=0)
            meta = InputMetadata(prompt_lens=list(seq_lens),
                                 context_lens=np.zeros((0,), dtype=np.int32))
        kq, kk = jax.random.split(key_rng)
        query = jax.random.normal(kq, (T, n_q * head_size), dtype=dtype)
        key = jax.random.normal(kk, (T, n_kv * head_size), dtype=dtype)

        # Snapshot inputs BEFORE forward: query/key are donated (in-place).
        q_np = np.asarray(query).astype(np.float32)
        k_np = np.asarray(key).astype(np.float32)
        pos_np = np.asarray(positions)
        q_ref, k_ref = reference_rope(pos_np, q_np, k_np, seq_lens, is_continue,
                                      head_size, rotary_dim, base, config_seq_length)

        rope = DynamicNTKScalingRotaryEmbeddingQwen(
            head_size=head_size, rotary_dim=rotary_dim,
            max_position_embeddings=max_pos, base=base,
            is_neox_style=True, seq_length=config_seq_length)

        q_out, k_out = rope.forward(positions, query, key, meta, tile_t=tile_t)
        jax.block_until_ready((q_out, k_out))

        np.testing.assert_allclose(np.asarray(q_out).astype(np.float32), q_ref,
                                   atol=atol, rtol=rtol)
        np.testing.assert_allclose(np.asarray(k_out).astype(np.float32), k_ref,
                                   atol=atol, rtol=rtol)

    k0, k1, k2, k3 = jax.random.split(jax.random.PRNGKey(0), 4)
    # Prompt phase, full rotary, GQA (n_kv < n_q); auto tiling -> 2 grid steps.
    run_case(head_size=128, rotary_dim=128, n_q=4, n_kv=2,
             seq_lens=[6, 10], is_continue=False, key_rng=k0)
    # Prompt phase, partial rotary (rotary_dim < head_size); T=14 -> partial
    # final block with aliased outputs across 2 grid steps.
    run_case(head_size=128, rotary_dim=64, n_q=2, n_kv=2,
             seq_lens=[5, 9], is_continue=False, key_rng=k1)
    # Decode phase (context_lens path: one token per sequence, tiny T).
    run_case(head_size=128, rotary_dim=128, n_q=2, n_kv=2,
             seq_lens=[7, 12], is_continue=True, key_rng=k2)
    # bf16 q/k (+ bf16 tables, bf16 math), forced small tile -> 3 grid steps,
    # last block partial (T=20, tile_t=8).
    run_case(head_size=128, rotary_dim=128, n_q=4, n_kv=2,
             seq_lens=[8, 12], is_continue=False, key_rng=k3,
             dtype=jnp.bfloat16, tile_t=8, atol=5e-2, rtol=5e-2)

    print("KERNEL_OK")
</pallas_src>

<mosaic_0001>
module attributes {stable_mosaic.version = 11 : i64} {
  func.func @_rope_kernel(%arg0: i32, %arg1: memref<8x512xf32, #tpu.memory_space<vmem>>, %arg2: memref<8x256xf32, #tpu.memory_space<vmem>>, %arg3: memref<8x128xf32, #tpu.memory_space<vmem>>, %arg4: memref<8x128xf32, #tpu.memory_space<vmem>>, %arg5: memref<8x128xf32, #tpu.memory_space<vmem>>, %arg6: memref<8x512xf32, #tpu.memory_space<vmem>>, %arg7: memref<8x256xf32, #tpu.memory_space<vmem>>) attributes {dimension_semantics = [#tpu.dimension_semantics<parallel>], iteration_bounds = array<i64: 2>, scalar_prefetch = 0 : i64, scratch_operands = 0 : i64, tpu.core_type = #tpu.core_type<tc>, window_params = [{transform_indices = @transform_0, window_bounds = array<i64: 8, 512>}, {transform_indices = @transform_1, window_bounds = array<i64: 8, 256>}, {transform_indices = @transform_2, window_bounds = array<i64: 8, 128>}, {transform_indices = @transform_3, window_bounds = array<i64: 8, 128>}, {transform_indices = @transform_4, window_bounds = array<i64: 8, 128>}, {transform_indices = @transform_5, window_bounds = array<i64: 8, 512>}, {transform_indices = @transform_6, window_bounds = array<i64: 8, 256>}]} {
    %c0 = arith.constant 0 : index
    %c0_0 = arith.constant 0 : index
    %0 = vector.load %arg3[%c0, %c0_0] : memref<8x128xf32, #tpu.memory_space<vmem>>, vector<8x128xf32>
    %c0_1 = arith.constant 0 : index
    %c0_2 = arith.constant 0 : index
    %1 = vector.load %arg4[%c0_1, %c0_2] : memref<8x128xf32, #tpu.memory_space<vmem>>, vector<8x128xf32>
    %c0_3 = arith.constant 0 : index
    %c0_4 = arith.constant 0 : index
    %2 = vector.load %arg5[%c0_3, %c0_4] : memref<8x128xf32, #tpu.memory_space<vmem>>, vector<8x128xf32>
    %c0_5 = arith.constant 0 : index
    %c0_6 = arith.constant 0 : index
    %3 = vector.load %arg1[%c0_5, %c0_6] : memref<8x512xf32, #tpu.memory_space<vmem>>, vector<8x512xf32>
    %4 = tpu.concatenate %0, %0, %0, %0 in 1 : vector<8x128xf32>, vector<8x128xf32>, vector<8x128xf32>, vector<8x128xf32> -> vector<8x512xf32>
    %5 = tpu.concatenate %1, %1, %1, %1 in 1 : vector<8x128xf32>, vector<8x128xf32>, vector<8x128xf32>, vector<8x128xf32> -> vector<8x512xf32>
    %6 = tpu.concatenate %2, %2, %2, %2 in 1 : vector<8x128xf32>, vector<8x128xf32>, vector<8x128xf32>, vector<8x128xf32> -> vector<8x512xf32>
    %c448_i32 = arith.constant 448 : i32
    %7 = tpu.dynamic_rotate %3 by %c448_i32 dim 1 : vector<8x512xf32>, i32 -> vector<8x512xf32>
    %c64_i32 = arith.constant 64 : i32
    %8 = tpu.dynamic_rotate %3 by %c64_i32 dim 1 : vector<8x512xf32>, i32 -> vector<8x512xf32>
    %9 = arith.mulf %3, %4 : vector<8x512xf32>
    %10 = arith.mulf %7, %5 : vector<8x512xf32>
    %11 = arith.addf %9, %10 : vector<8x512xf32>
    %12 = arith.mulf %8, %6 : vector<8x512xf32>
    %13 = arith.addf %11, %12 : vector<8x512xf32>
    %c0_7 = arith.constant 0 : index
    %c0_8 = arith.constant 0 : index
    %14 = vector.load %arg6[%c0_7, %c0_8] : memref<8x512xf32, #tpu.memory_space<vmem>>, vector<8x512xf32>
    tpu.vector_store %arg6[%c0_7, %c0_8], %13 {strides = array<i32>} : memref<8x512xf32, #tpu.memory_space<vmem>>, vector<8x512xf32>,
    %c0_9 = arith.constant 0 : index
    %c0_10 = arith.constant 0 : index
    %15 = vector.load %arg2[%c0_9, %c0_10] : memref<8x256xf32, #tpu.memory_space<vmem>>, vector<8x256xf32>
    %16 = tpu.concatenate %0, %0 in 1 : vector<8x128xf32>, vector<8x128xf32> -> vector<8x256xf32>
    %17 = tpu.concatenate %1, %1 in 1 : vector<8x128xf32>, vector<8x128xf32> -> vector<8x256xf32>
    %18 = tpu.concatenate %2, %2 in 1 : vector<8x128xf32>, vector<8x128xf32> -> vector<8x256xf32>
    %c192_i32 = arith.constant 192 : i32
    %19 = tpu.dynamic_rotate %15 by %c192_i32 dim 1 : vector<8x256xf32>, i32 -> vector<8x256xf32>
    %c64_i32_11 = arith.constant 64 : i32
    %20 = tpu.dynamic_rotate %15 by %c64_i32_11 dim 1 : vector<8x256xf32>, i32 -> vector<8x256xf32>
    %21 = arith.mulf %15, %16 : vector<8x256xf32>
    %22 = arith.mulf %19, %17 : vector<8x256xf32>
    %23 = arith.addf %21, %22 : vector<8x256xf32>
    %24 = arith.mulf %20, %18 : vector<8x256xf32>
    %25 = arith.addf %23, %24 : vector<8x256xf32>
    %c0_12 = arith.constant 0 : index
    %c0_13 = arith.constant 0 : index
    %26 = vector.load %arg7[%c0_12, %c0_13] : memref<8x256xf32, #tpu.memory_space<vmem>>, vector<8x256xf32>
    tpu.vector_store %arg7[%c0_12, %c0_13], %25 {strides = array<i32>} : memref<8x256xf32, #tpu.memory_space<vmem>>, vector<8x256xf32>,
    return
  }
  func.func @transform_0(%arg0: i32) -> (i32, i32) {
    %c0_i32 = arith.constant 0 : i32
    %c0_i32_0 = arith.constant 0 : i32
    return %arg0, %c0_i32 : i32, i32
  }
  func.func @transform_1(%arg0: i32) -> (i32, i32) {
    %c0_i32 = arith.constant 0 : i32
    %c0_i32_0 = arith.constant 0 : i32
    return %arg0, %c0_i32 : i32, i32
  }
  func.func @transform_2(%arg0: i32) -> (i32, i32) {
    %c0_i32 = arith.constant 0 : i32
    %c0_i32_0 = arith.constant 0 : i32
    return %arg0, %c0_i32 : i32, i32
  }
  func.func @transform_3(%arg0: i32) -> (i32, i32) {
    %c0_i32 = arith.constant 0 : i32
    %c0_i32_0 = arith.constant 0 : i32
    return %arg0, %c0_i32 : i32, i32
  }
  func.func @transform_4(%arg0: i32) -> (i32, i32) {
    %c0_i32 = arith.constant 0 : i32
    %c0_i32_0 = arith.constant 0 : i32
    return %arg0, %c0_i32 : i32, i32
  }
  func.func @transform_5(%arg0: i32) -> (i32, i32) {
    %c0_i32 = arith.constant 0 : i32
    %c0_i32_0 = arith.constant 0 : i32
    return %arg0, %c0_i32 : i32, i32
  }
  func.func @transform_6(%arg0: i32) -> (i32, i32) {
    %c0_i32 = arith.constant 0 : i32
    %c0_i32_0 = arith.constant 0 : i32
    return %arg0, %c0_i32 : i32, i32
  }
}

</mosaic_0001>

<llo_original>
// kernel: tpu_custom_call.1
$region0: #{tpu_custom_call.1}
  #allocation0 [shape = 'u32[]', space=smem, size = 0x4, offset = 0x4, fixed_abs, tag = 'smem constant byte address 0x4 - core index']
  #allocation1 [shape = 'u32[144,128]{1,0:T(1,128)}', space=vmem, size = 0x12000, scoped, tag = 'internal scratch']
  %s0 = inlined_call_operand.hbm [shape: f32[16,512], index: 0, kind: input, shape index: {}, may-alias: {0,5}]
  %s1 = inlined_call_operand.hbm [shape: f32[16,256], index: 1, kind: input, shape index: {}, may-alias: {1,6}]
  %s2 = inlined_call_operand.vmem [shape: f32[16,128], index: 2, kind: input, shape index: {}]
  %s3 = inlined_call_operand.vmem [shape: f32[16,128], index: 3, kind: input, shape index: {}]
  %s4 = inlined_call_operand.vmem [shape: f32[16,128], index: 4, kind: input, shape index: {}]
  %s5 = inlined_call_operand.hbm [shape: f32[16,512], index: 5, kind: output, shape index: {0}, may-alias: {0,5}]
  %s6 = inlined_call_operand.hbm [shape: f32[16,256], index: 6, kind: output, shape index: {1}, may-alias: {1,6}]
  %7 = xla_tuple %s5, %s6
  %s8 = sld [smem:[#allocation0]]
  $region69: #{tpu_custom_call.1} parent=0
    _
  %s10 = ssub.s32 1, %s8
  %s11 = scalar_select 0, %s10, %s8
  $region1: #{tpu_custom_call.1} parent=0
    #allocation2 [shape = 'u8[32768]{0}', space=vmem, size = 0x8000, scoped, tag = 'input window, operand 0']
    #allocation3 [shape = 's32[2]{0}', space=sflag, size = 0x8, scoped, tag = 'scoped memory for tpu_custom_call.1']
    #allocation4 [shape = 's32[2]{0}', space=sflag, size = 0x8, scoped, tag = 'scoped memory for tpu_custom_call.1']
    #allocation5 [shape = 'u8[16384]{0}', space=vmem, size = 0x4000, scoped, tag = 'input window, operand 1']
    #allocation6 [shape = 's32[2]{0}', space=sflag, size = 0x8, scoped, tag = 'scoped memory for tpu_custom_call.1']
    #allocation7 [shape = 'u8[32768]{0}', space=vmem, size = 0x8000, scoped, tag = 'output window, operand 0']
    #allocation8 [shape = 'u8[16384]{0}', space=vmem, size = 0x4000, scoped, tag = 'output window, operand 1']
    #allocation9 [shape = 's32[2]{0}', space=sflag, size = 0x8, scoped, tag = 'scoped memory for tpu_custom_call.1']
    %12 = vsyncpa [#allocation3], 0
    %s13 = scalar_lea.sflag [#allocation3], 1
    %14 = vsyncpa %s13, 0
    %15 = vsyncpa [#allocation6], 0
    %s16 = scalar_lea.sflag [#allocation6], 1
    %17 = vsyncpa %s16, 0
    %18 = vsyncpa [#allocation4], 0
    %s19 = scalar_lea.sflag [#allocation4], 1
    %20 = vsyncpa %s19, 0
    %21 = vsyncpa [#allocation9], 0
    %s22 = scalar_lea.sflag [#allocation9], 1
    %23 = vsyncpa %s22, 0
    loop: start=0, step=1, limit=4
    $region2: #{tpu_custom_call.1} parent=1 // loop_pre_header
      _
    $region3: #{tpu_custom_call.1} parent=1 // loop_header
      %s25 = sphi 0, %s29
      %p26 = scmp.ge.s32.totalorder %s25, 4
      %s35 = sphi 0, %s37
      %s38 = sphi 0, %s35
      %s39 = sphi 0, %s38
      %s55 = sphi 0, %s39
      %s61 = sphi 0, %s63
      %s64 = sphi 0, %s61
      %s65 = sphi 0, %s64
      %s81 = sphi 0, %s65
      %s87 = sphi 0, %s89
      %s90 = sphi 0, %s87
      %s91 = sphi 0, %s90
      %s107 = sphi 0, %s91
      %s113 = sphi 0, %s115
      %s116 = sphi 0, %s113
      %s117 = sphi 0, %s116
      %s133 = sphi 0, %s117
      %s139 = sphi 0, %s141
      %s142 = sphi 0, %s139
      %s143 = sphi 0, %s142
      %s159 = sphi 0, %s143
      %s165 = sphi 0, %s167
      %s168 = sphi 0, %s165
      %s169 = sphi 0, %s168
      %s185 = sphi 0, %s169
      %s191 = sphi 0, %s193
      %s194 = sphi 0, %s191
      %s195 = sphi 0, %s194
      %s211 = sphi 0, %s195
    $region4: #{tpu_custom_call.1} parent=1 // loop_header_branch
      %28 = sbr.rel (%p26) target = $region8
    $region5: #{tpu_custom_call.1} parent=1 // loop_body
      %s30 = ssub.s32 %s25, 1
      %s31 = ssub.s32 %s25, 2
      %s32 = sadd.s32 %s25, 1
      %s33 = ssub.s32 %s25, %s32
      %p34 = scmp.eq.s32.totalorder %s33, 0
      %s36 = sadd.s32 %s35, 1
      %s37 = scalar_select %p34, %s35, %s36
      %p40 = pneg %p34
      %p41 = scmp.eq.s32.totalorder %s25, 1
      %p42 = por %p40, %p41
      %p43 = scmp.ne.s32.totalorder %s35, %s38
      %p44 = scmp.eq.s32.totalorder %s25, 0
      %p45 = por %p43, %p44
      %p46 = scmp.ne.s32.totalorder %s35, %s38
      %p47 = scmp.eq.s32.totalorder %s30, 1
      %p48 = por %p46, %p47
      %p49 = scmp.ne.s32.totalorder %s38, %s39
      %p50 = scmp.eq.s32.totalorder %s30, 0
      %p51 = por %p49, %p50
      %p52 = scmp.ne.s32.totalorder %s38, %s39
      %p53 = scmp.eq.s32.totalorder %s31, 1
      %p54 = por %p52, %p53
      %p56 = scmp.ne.s32.totalorder %s39, %s55
      %p57 = scmp.eq.s32.totalorder %s31, 0
      %p58 = por %p56, %p57
      %s59 = ssub.s32 %s25, %s32
      %p60 = scmp.eq.s32.totalorder %s59, 0
      %s62 = sadd.s32 %s61, 1
      %s63 = scalar_select %p60, %s61, %s62
      %p66 = pneg %p60
      %p67 = scmp.eq.s32.totalorder %s25, 1
      %p68 = por %p66, %p67
      %p69 = scmp.ne.s32.totalorder %s61, %s64
      %p70 = scmp.eq.s32.totalorder %s25, 0
      %p71 = por %p69, %p70
      %p72 = scmp.ne.s32.totalorder %s61, %s64
      %p73 = scmp.eq.s32.totalorder %s30, 1
      %p74 = por %p72, %p73
      %p75 = scmp.ne.s32.totalorder %s64, %s65
      %p76 = scmp.eq.s32.totalorder %s30, 0
      %p77 = por %p75, %p76
      %p78 = scmp.ne.s32.totalorder %s64, %s65
      %p79 = scmp.eq.s32.totalorder %s31, 1
      %p80 = por %p78, %p79
      %p82 = scmp.ne.s32.totalorder %s65, %s81
      %p83 = scmp.eq.s32.totalorder %s31, 0
      %p84 = por %p82, %p83
      %s85 = ssub.s32 %s25, %s32
      %p86 = scmp.eq.s32.totalorder %s85, 0
      %s88 = sadd.s32 %s87, 1
      %s89 = scalar_select %p86, %s87, %s88
      %p92 = pneg %p86
      %p93 = scmp.eq.s32.totalorder %s25, 1
      %p94 = por %p92, %p93
      %p95 = scmp.ne.s32.totalorder %s87, %s90
      %p96 = scmp.eq.s32.totalorder %s25, 0
      %p97 = por %p95, %p96
      %p98 = scmp.ne.s32.totalorder %s87, %s90
      %p99 = scmp.eq.s32.totalorder %s30, 1
      %p100 = por %p98, %p99
      %p101 = scmp.ne.s32.totalorder %s90, %s91
      %p102 = scmp.eq.s32.totalorder %s30, 0
      %p103 = por %p101, %p102
      %p104 = scmp.ne.s32.totalorder %s90, %s91
      %p105 = scmp.eq.s32.totalorder %s31, 1
      %p106 = por %p104, %p105
      %p108 = scmp.ne.s32.totalorder %s91, %s107
      %p109 = scmp.eq.s32.totalorder %s31, 0
      %p110 = por %p108, %p109
      %s111 = ssub.s32 %s25, %s32
      %p112 = scmp.eq.s32.totalorder %s111, 0
      %s114 = sadd.s32 %s113, 1
      %s115 = scalar_select %p112, %s113, %s114
      %p118 = pneg %p112
      %p119 = scmp.eq.s32.totalorder %s25, 1
      %p120 = por %p118, %p119
      %p121 = scmp.ne.s32.totalorder %s113, %s116
      %p122 = scmp.eq.s32.totalorder %s25, 0
      %p123 = por %p121, %p122
      %p124 = scmp.ne.s32.totalorder %s113, %s116
      %p125 = scmp.eq.s32.totalorder %s30, 1
      %p126 = por %p124, %p125
      %p127 = scmp.ne.s32.totalorder %s116, %s117
      %p128 = scmp.eq.s32.totalorder %s30, 0
      %p129 = por %p127, %p128
      %p130 = scmp.ne.s32.totalorder %s116, %s117
      %p131 = scmp.eq.s32.totalorder %s31, 1
      %p132 = por %p130, %p131
      %p134 = scmp.ne.s32.totalorder %s117, %s133
      %p135 = scmp.eq.s32.totalorder %s31, 0
      %p136 = por %p134, %p135
      %s137 = ssub.s32 %s25, %s32
      %p138 = scmp.eq.s32.totalorder %s137, 0
      %s140 = sadd.s32 %s139, 1
      %s141 = scalar_select %p138, %s139, %s140
      %p144 = pneg %p138
      %p145 = scmp.eq.s32.totalorder %s25, 1
      %p146 = por %p144, %p145
      %p147 = scmp.ne.s32.totalorder %s139, %s142
      %p148 = scmp.eq.s32.totalorder %s25, 0
      %p149 = por %p147, %p148
      %p150 = scmp.ne.s32.totalorder %s139, %s142
      %p151 = scmp.eq.s32.totalorder %s30, 1
      %p152 = por %p150, %p151
      %p153 = scmp.ne.s32.totalorder %s142, %s143
      %p154 = scmp.eq.s32.totalorder %s30, 0
      %p155 = por %p153, %p154
      %p156 = scmp.ne.s32.totalorder %s142, %s143
      %p157 = scmp.eq.s32.totalorder %s31, 1
      %p158 = por %p156, %p157
      %p160 = scmp.ne.s32.totalorder %s143, %s159
      %p161 = scmp.eq.s32.totalorder %s31, 0
      %p162 = por %p160, %p161
      %s163 = ssub.s32 %s25, %s32
      %p164 = scmp.eq.s32.totalorder %s163, 0
      %s166 = sadd.s32 %s165, 1
      %s167 = scalar_select %p164, %s165, %s166
      %p170 = pneg %p164
      %p171 = scmp.eq.s32.totalorder %s25, 1
      %p172 = por %p170, %p171
      %p173 = scmp.ne.s32.totalorder %s165, %s168
      %p174 = scmp.eq.s32.totalorder %s25, 0
      %p175 = por %p173, %p174
      %p176 = scmp.ne.s32.totalorder %s165, %s168
      %p177 = scmp.eq.s32.totalorder %s30, 1
      %p178 = por %p176, %p177
      %p179 = scmp.ne.s32.totalorder %s168, %s169
      %p180 = scmp.eq.s32.totalorder %s30, 0
      %p181 = por %p179, %p180
      %p182 = scmp.ne.s32.totalorder %s168, %s169
      %p183 = scmp.eq.s32.totalorder %s31, 1
      %p184 = por %p182, %p183
      %p186 = scmp.ne.s32.totalorder %s169, %s185
      %p187 = scmp.eq.s32.totalorder %s31, 0
      %p188 = por %p186, %p187
      %s189 = ssub.s32 %s25, %s32
      %p190 = scmp.eq.s32.totalorder %s189, 0
      %s192 = sadd.s32 %s191, 1
      %s193 = scalar_select %p190, %s191, %s192
      %p196 = pneg %p190
      %p197 = scmp.eq.s32.totalorder %s25, 1
      %p198 = por %p196, %p197
      %p199 = scmp.ne.s32.totalorder %s191, %s194
      %p200 = scmp.eq.s32.totalorder %s25, 0
      %p201 = por %p199, %p200
      %p202 = scmp.ne.s32.totalorder %s191, %s194
      %p203 = scmp.eq.s32.totalorder %s30, 1
      %p204 = por %p202, %p203
      %p205 = scmp.ne.s32.totalorder %s194, %s195
      %p206 = scmp.eq.s32.totalorder %s30, 0
      %p207 = por %p205, %p206
      %p208 = scmp.ne.s32.totalorder %s194, %s195
      %p209 = scmp.eq.s32.totalorder %s31, 1
      %p210 = por %p208, %p209
      %p212 = scmp.ne.s32.totalorder %s195, %s211
      %p213 = scmp.eq.s32.totalorder %s31, 0
      %p214 = por %p212, %p213
      %p215 = scmp.le.s32.totalorder 1, %s25
      %p216 = scmp.lt.s32.totalorder %s25, 3
      %p217 = pnand %p215, %p216
      %p218 = pneg %p217
      // Predicated region
      $region9: #{tpu_custom_call.1} parent=5 // pred_check
        _
      $region10: #{tpu_custom_call.1} parent=5 // pred_check_branch
        %220 = sbr.rel (%p217) target = $region12
      $region11: #{tpu_custom_call.1} parent=5 // pred_region
        %s221 = ssub.s32 %s25, 1
      $region12: #{tpu_custom_call.1} parent=5 // pred_fallthru
        _
      %p222 = scmp.lt.s32.totalorder %s25, 2
      // Predicated region
      $region13: #{tpu_custom_call.1} parent=5 // pred_check
        %p223 = pneg %p222
      $region14: #{tpu_custom_call.1} parent=5 // pred_check_branch
        %225 = sbr.rel (%p223) target = $region16
      $region15: #{tpu_custom_call.1} parent=5 // pred_region
        // Predicated region
        $region17: #{tpu_custom_call.1} parent=15 // pred_check
          %p226 = pneg %p45
        $region18: #{tpu_custom_call.1} parent=15 // pred_check_branch
          %228 = sbr.rel (%p226) target = $region20
        $region19: #{tpu_custom_call.1} parent=15 // pred_region
          %s229 = sand.u32 %s35, 1
          %s230 = scalar_lea.sflag [#allocation3], %s229
          %s231 = sand.u32 %s35, 1
          %s232 = smul.addr %s231, 32
          %s233 = scalar_lea.vmem [#allocation2], %s232
          %s235 = ssub.s32 512, 512
          %236 = vsyncadd %s230, %s235
          %s237 = smul.addr %s25, 4
          %s238 = smul.addr %s237, 128
          %s239 = scalar_lea.hbm %s0, %s238
          %s241 = sshll.u32 %s233, 4
          %s242 = int_to_ptr.vmem [resolvable:$true] %s241
          %244 = dma.hbm_to_vmem [thread:$0]  %s239, 512, %s242, %s230
        $region20: #{tpu_custom_call.1} parent=15 // pred_fallthru
          _
        // Predicated region
        $region21: #{tpu_custom_call.1} parent=15 // pred_check
          %p245 = pneg %p71
        $region22: #{tpu_custom_call.1} parent=15 // pred_check_branch
          %247 = sbr.rel (%p245) target = $region24
        $region23: #{tpu_custom_call.1} parent=15 // pred_region
          %s248 = sand.u32 %s61, 1
          %s249 = scalar_lea.sflag [#allocation6], %s248
          %s250 = sand.u32 %s61, 1
          %s251 = smul.addr %s250, 16
          %s252 = scalar_lea.vmem [#allocation5], %s251
          %s254 = ssub.s32 256, 256
          %255 = vsyncadd %s249, %s254
          %s256 = smul.addr %s25, 2
          %s257 = smul.addr %s256, 128
          %s258 = scalar_lea.hbm %s1, %s257
          %s260 = sshll.u32 %s252, 4
          %s261 = int_to_ptr.vmem [resolvable:$true] %s260
          %263 = dma.hbm_to_vmem [thread:$0]  %s258, 256, %s261, %s249
        $region24: #{tpu_custom_call.1} parent=15 // pred_fallthru
          _
        // Predicated region
        $region25: #{tpu_custom_call.1} parent=15 // pred_check
          %p264 = pneg %p97
        $region26: #{tpu_custom_call.1} parent=15 // pred_check_branch
          %266 = sbr.rel (%p264) target = $region28
        $region27: #{tpu_custom_call.1} parent=15 // pred_region
          %p267 = scmp.lt.s32.totalorder %s25, 1
          %s268 = scalar_select %p267, %s25, 1
          %s269 = smul.addr %s268, 8
          %s270 = scalar_lea.vmem %s2, %s269
        $region28: #{tpu_custom_call.1} parent=15 // pred_fallthru
          _
        // Predicated region
        $region29: #{tpu_custom_call.1} parent=15 // pred_check
          %p271 = pneg %p123
        $region30: #{tpu_custom_call.1} parent=15 // pred_check_branch
          %273 = sbr.rel (%p271) target = $region32
        $region31: #{tpu_custom_call.1} parent=15 // pred_region
          %p274 = scmp.lt.s32.totalorder %s25, 1
          %s275 = scalar_select %p274, %s25, 1
          %s276 = smul.addr %s275, 8
          %s277 = scalar_lea.vmem %s3, %s276
        $region32: #{tpu_custom_call.1} parent=15 // pred_fallthru
          _
        // Predicated region
        $region33: #{tpu_custom_call.1} parent=15 // pred_check
          %p278 = pneg %p149
        $region34: #{tpu_custom_call.1} parent=15 // pred_check_branch
          %280 = sbr.rel (%p278) target = $region36
        $region35: #{tpu_custom_call.1} parent=15 // pred_region
          %p281 = scmp.lt.s32.totalorder %s25, 1
          %s282 = scalar_select %p281, %s25, 1
          %s283 = smul.addr %s282, 8
          %s284 = scalar_lea.vmem %s4, %s283
        $region36: #{tpu_custom_call.1} parent=15 // pred_fallthru
          _
      $region16: #{tpu_custom_call.1} parent=5 // pred_fallthru
        _
      %p285 = scmp.le.s32.totalorder 1, %s25
      %p286 = scmp.lt.s32.totalorder %s25, 3
      %p287 = pnand %p285, %p286
      %p288 = pneg %p287
      // Predicated region
      $region37: #{tpu_custom_call.1} parent=5 // pred_check
        _
      $region38: #{tpu_custom_call.1} parent=5 // pred_check_branch
        %290 = sbr.rel (%p287) target = $region40
      $region39: #{tpu_custom_call.1} parent=5 // pred_region
        %s291 = ssub.s32 %s25, 1
        %s292 = sand.u32 %s38, 1
        %s293 = scalar_lea.sflag [#allocation3], %s292
        %s294 = sand.u32 %s38, 1
        %s295 = smul.addr %s294, 32
        %s296 = scalar_lea.vmem [#allocation2], %s295
        // Predicated region
        $region41: #{tpu_custom_call.1} parent=39 // pred_check
          %p297 = pneg %p51
        $region42: #{tpu_custom_call.1} parent=39 // pred_check_branch
          %299 = sbr.rel (%p297) target = $region44
        $region43: #{tpu_custom_call.1} parent=39 // pred_region
          %300 = dma.done %s293, 512
        $region44: #{tpu_custom_call.1} parent=39 // pred_fallthru
          _
        %s301 = sand.u32 %s64, 1
        %s302 = scalar_lea.sflag [#allocation6], %s301
        %s303 = sand.u32 %s64, 1
        %s304 = smul.addr %s303, 16
        %s305 = scalar_lea.vmem [#allocation5], %s304
        // Predicated region
        $region45: #{tpu_custom_call.1} parent=39 // pred_check
          %p306 = pneg %p77
        $region46: #{tpu_custom_call.1} parent=39 // pred_check_branch
          %308 = sbr.rel (%p306) target = $region48
        $region47: #{tpu_custom_call.1} parent=39 // pred_region
          %309 = dma.done %s302, 256
        $region48: #{tpu_custom_call.1} parent=39 // pred_fallthru
          _
        %s310 = sand.u32 %s38, 1
        %s311 = scalar_lea.sflag [#allocation3], %s310
        %s312 = sand.u32 %s38, 1
        %s313 = smul.addr %s312, 32
        %s314 = scalar_lea.vmem [#allocation2], %s313
        %p315 = pneg %p51
        %p316 = pneg %p48
        %s317 = sand.u32 %s64, 1
        %s318 = scalar_lea.sflag [#allocation6], %s317
        %s319 = sand.u32 %s64, 1
        %s320 = smul.addr %s319, 16
        %s321 = scalar_lea.vmem [#allocation5], %s320
        %p322 = pneg %p77
        %p323 = pneg %p74
        %p324 = scmp.lt.s32.totalorder %s30, 1
        %s325 = scalar_select %p324, %s30, 1
        %s326 = smul.addr %s325, 8
        %s327 = scalar_lea.vmem %s2, %s326
        %p328 = pneg %p103
        %p329 = pneg %p100
        %p330 = scmp.lt.s32.totalorder %s30, 1
        %s331 = scalar_select %p330, %s30, 1
        %s332 = smul.addr %s331, 8
        %s333 = scalar_lea.vmem %s3, %s332
        %p334 = pneg %p129
        %p335 = pneg %p126
        %p336 = scmp.lt.s32.totalorder %s30, 1
        %s337 = scalar_select %p336, %s30, 1
        %s338 = smul.addr %s337, 8
        %s339 = scalar_lea.vmem %s4, %s338
        %p340 = pneg %p155
        %p341 = pneg %p152
        %p342 = pneg %p181
        %p343 = pneg %p178
        %s344 = sand.u32 %s168, 1
        %s345 = scalar_lea.sflag [#allocation4], %s344
        %s346 = sand.u32 %s168, 1
        %s347 = smul.addr %s346, 32
        %s348 = scalar_lea.vmem [#allocation7], %s347
        %p349 = pneg %p207
        %p350 = pneg %p204
        %s351 = sand.u32 %s194, 1
        %s352 = scalar_lea.sflag [#allocation9], %s351
        %s353 = sand.u32 %s194, 1
        %s354 = smul.addr %s353, 16
        %s355 = scalar_lea.vmem [#allocation8], %s354
        %p356 = scmp.lt.s32.totalorder %s30, 1
        %s357 = scalar_select %p356, %s30, 1
        %s358 = smul.addr %s357, 8
        %s359 = scalar_lea.vmem %s2, %s358
        %p360 = scmp.lt.s32.totalorder %s30, 1
        %s361 = scalar_select %p360, %s30, 1
        %s362 = smul.addr %s361, 8
        %s363 = scalar_lea.vmem %s3, %s362
        %p364 = scmp.lt.s32.totalorder %s30, 1
        %s365 = scalar_select %p364, %s30, 1
        %s366 = smul.addr %s365, 8
        %s367 = scalar_lea.vmem %s4, %s366
        %v368 = vld [vmem:[%s359] sm:$0xff]
        %v369 = vld [vmem:[%s363] sm:$0xff]
        %v370 = vld [vmem:[%s367] sm:$0xff]
        %v371 = vld [vmem:[%s296] sm:$0xff]
        %v372 = vld [vmem:[%s296 + $0x8] sm:$0xff]
        %v373 = vld [vmem:[%s296 + $0x10] sm:$0xff]
        %v374 = vld [vmem:[%s296 + $0x18] sm:$0xff]
        %375 = vrot.lane.b32.xlu0 %v371, 64
        %v376 = vpop.permute.xlu0 %375
        %377 = vrot.lane.b32.xlu0 %v372, 64
        %v378 = vpop.permute.xlu0 %377
        %379 = vrot.lane.b32.xlu0 %v373, 64
        %v380 = vpop.permute.xlu0 %379
        %381 = vrot.lane.b32.xlu0 %v374, 64
        %v382 = vpop.permute.xlu0 %381
        %v383 = vlaneseq
        %v384 = vand.u32 %v383, 127
        %vm385 = vcmp.lt.s32.totalorder %v384, 64
        %v386 = vsel %vm385, %v380, %v382
        %v387 = vsel %vm385, %v378, %v380
        %v388 = vsel %vm385, %v376, %v378
        %v389 = vsel %vm385, %v382, %v376
        %v390 = vmul.f32 %v371, %v368
        %v391 = vmul.f32 %v372, %v368
        %v392 = vmul.f32 %v373, %v368
        %v393 = vmul.f32 %v374, %v368
        %v394 = vmul.f32 %v388, %v369
        %v395 = vmul.f32 %v387, %v369
        %v396 = vmul.f32 %v386, %v369
        %v397 = vmul.f32 %v389, %v369
        %v398 = vadd.f32 %v390, %v394
        %v399 = vadd.f32 %v391, %v395
        %v400 = vadd.f32 %v392, %v396
        %v401 = vadd.f32 %v393, %v397
        %v402 = vmul.f32 %v389, %v370
        %v403 = vmul.f32 %v388, %v370
        %v404 = vmul.f32 %v387, %v370
        %v405 = vmul.f32 %v386, %v370
        %v406 = vadd.f32 %v398, %v402
        %v407 = vadd.f32 %v399, %v403
        %v408 = vadd.f32 %v400, %v404
        %v409 = vadd.f32 %v401, %v405
        %410 = vst [vmem:[%s348] sm:$0xff] %v406
        %411 = vst [vmem:[%s348 + $0x8] sm:$0xff] %v407
        %412 = vst [vmem:[%s348 + $0x10] sm:$0xff] %v408
        %413 = vst [vmem:[%s348 + $0x18] sm:$0xff] %v409
        %v414 = vld [vmem:[%s305] sm:$0xff]
        %v415 = vld [vmem:[%s305 + $0x8] sm:$0xff]
        %416 = vrot.lane.b32.xlu0 %v414, 64
        %v417 = vpop.permute.xlu0 %416
        %418 = vrot.lane.b32.xlu0 %v415, 64
        %v419 = vpop.permute.xlu0 %418
        %v420 = vsel %vm385, %v417, %v419
        %v421 = vsel %vm385, %v419, %v417
        %v422 = vmul.f32 %v414, %v368
        %v423 = vmul.f32 %v415, %v368
        %v424 = vmul.f32 %v420, %v369
        %v425 = vmul.f32 %v421, %v369
        %v426 = vadd.f32 %v422, %v424
        %v427 = vadd.f32 %v423, %v425
        %v428 = vmul.f32 %v421, %v370
        %v429 = vmul.f32 %v420, %v370
        %v430 = vadd.f32 %v426, %v428
        %v431 = vadd.f32 %v427, %v429
        %432 = vst [vmem:[%s355] sm:$0xff] %v430
        %433 = vst [vmem:[%s355 + $0x8] sm:$0xff] %v431
        %s434 = sand.u32 %s168, 1
        %s435 = scalar_lea.sflag [#allocation4], %s434
        %s436 = sand.u32 %s168, 1
        %s437 = smul.addr %s436, 32
        %s438 = scalar_lea.vmem [#allocation7], %s437
        %s439 = sand.u32 %s194, 1
        %s440 = scalar_lea.sflag [#allocation9], %s439
        %s441 = sand.u32 %s194, 1
        %s442 = smul.addr %s441, 16
        %s443 = scalar_lea.vmem [#allocation8], %s442
        // Predicated region
        $region49: #{tpu_custom_call.1} parent=39 // pred_check
          %p444 = pneg %p178
        $region50: #{tpu_custom_call.1} parent=39 // pred_check_branch
          %446 = sbr.rel (%p444) target = $region52
        $region51: #{tpu_custom_call.1} parent=39 // pred_region
          %s448 = ssub.s32 512, 512
          %449 = vsyncadd %s435, %s448
          %s450 = smul.addr %s30, 4
          %s451 = smul.addr %s450, 128
          %s452 = scalar_lea.hbm %s5, %s451
          %s454 = sshll.u32 %s438, 4
          %s455 = int_to_ptr.vmem [resolvable:$true] %s454
          %457 = dma.vmem_to_hbm [thread:$0]  %s455, 512, %s452, %s435
        $region52: #{tpu_custom_call.1} parent=39 // pred_fallthru
          _
        // Predicated region
        $region53: #{tpu_custom_call.1} parent=39 // pred_check
          %p458 = pneg %p204
        $region54: #{tpu_custom_call.1} parent=39 // pred_check_branch
          %460 = sbr.rel (%p458) target = $region56
        $region55: #{tpu_custom_call.1} parent=39 // pred_region
          %s462 = ssub.s32 256, 256
          %463 = vsyncadd %s440, %s462
          %s464 = smul.addr %s30, 2
          %s465 = smul.addr %s464, 128
          %s466 = scalar_lea.hbm %s6, %s465
          %s468 = sshll.u32 %s443, 4
          %s469 = int_to_ptr.vmem [resolvable:$true] %s468
          %471 = dma.vmem_to_hbm [thread:$0]  %s469, 256, %s466, %s440
        $region56: #{tpu_custom_call.1} parent=39 // pred_fallthru
          _
      $region40: #{tpu_custom_call.1} parent=5 // pred_fallthru
        _
      %p472 = scmp.le.s32.totalorder 2, %s25
      // Predicated region
      $region57: #{tpu_custom_call.1} parent=5 // pred_check
        %p473 = pneg %p472
      $region58: #{tpu_custom_call.1} parent=5 // pred_check_branch
        %475 = sbr.rel (%p473) target = $region60
      $region59: #{tpu_custom_call.1} parent=5 // pred_region
        %s476 = ssub.s32 %s25, 2
        // Predicated region
        $region61: #{tpu_custom_call.1} parent=59 // pred_check
          %p477 = pneg %p184
        $region62: #{tpu_custom_call.1} parent=59 // pred_check_branch
          %479 = sbr.rel (%p477) target = $region64
        $region63: #{tpu_custom_call.1} parent=59 // pred_region
          %s480 = sand.u32 %s169, 1
          %s481 = scalar_lea.sflag [#allocation4], %s480
          %s482 = sand.u32 %s169, 1
          %s483 = smul.addr %s482, 32
          %s484 = scalar_lea.vmem [#allocation7], %s483
          %485 = dma.done %s481, 512
        $region64: #{tpu_custom_call.1} parent=59 // pred_fallthru
          _
        // Predicated region
        $region65: #{tpu_custom_call.1} parent=59 // pred_check
          %p486 = pneg %p210
        $region66: #{tpu_custom_call.1} parent=59 // pred_check_branch
          %488 = sbr.rel (%p486) target = $region68
        $region67: #{tpu_custom_call.1} parent=59 // pred_region
          %s489 = sand.u32 %s195, 1
          %s490 = scalar_lea.sflag [#allocation9], %s489
          %s491 = sand.u32 %s195, 1
          %s492 = smul.addr %s491, 16
          %s493 = scalar_lea.vmem [#allocation8], %s492
          %494 = dma.done %s490, 256
        $region68: #{tpu_custom_call.1} parent=59 // pred_fallthru
          _
      $region60: #{tpu_custom_call.1} parent=5 // pred_fallthru
        _
    $region6: #{tpu_custom_call.1} parent=1 // loop_footer
      %s29 = sadd.s32 1, %s25
    $region7: #{tpu_custom_call.1} parent=1 // loop_footer_branch
      %24 = sbr.rel target = $region3
    $region8: #{tpu_custom_call.1} parent=1 // loop_exit
      _
    %495 = vsyncpa [#allocation3], 1
    %s496 = scalar_lea.sflag [#allocation3], 1
    %497 = vsyncpa %s496, 1
    %498 = vsyncpa [#allocation6], 1
    %s499 = scalar_lea.sflag [#allocation6], 1
    %500 = vsyncpa %s499, 1
    %501 = vsyncpa [#allocation4], 1
    %s502 = scalar_lea.sflag [#allocation4], 1
    %503 = vsyncpa %s502, 1
    %504 = vsyncpa [#allocation9], 1
    %s505 = scalar_lea.sflag [#allocation9], 1
    %506 = vsyncpa %s505, 1

</llo_original>
